<compile_context>
chip_gen: v7x
topology: tpu7x:2x2x1
jax: 0.10.0
libtpu: 0.0.40
codegen_flags: <defaults>
</compile_context>

<pallas_src>
import functools

import jax
import jax.numpy as jnp
from jax.experimental import pallas as pl
from jax.experimental.pallas import tpu as pltpu


def _round_up(x, m):
    return (x + m - 1) // m * m


def fusion_kernel(scal_ref, fg_ref, fl_ref, gate_ref, wc_ref, bc_ref,
                  wca1_ref, wca2_ref, out_ref, *, cout, cout_pad):
    fg = fg_ref[...].astype(jnp.float32)          # (TB, Cin)
    fl = fl_ref[...].astype(jnp.float32)          # (TB, Cin)

    # 1) dot-product similarity S = sum(F_g * F_l, dim=1, keepdim=True)
    s = jnp.sum(fg * fl, axis=1, keepdims=True)   # (TB, 1)

    # 2) gate: MLP(1->H) + ReLU, then softmax over 2 logits == sigmoid(logit difference).
    w1 = gate_ref[0:1, :]                         # (1, H)
    b1 = gate_ref[1:2, :]                         # (1, H)
    dw = gate_ref[2:3, :]                         # (1, H)  == w2[:,0] - w2[:,1]
    h = jnp.maximum(s * w1 + b1, 0.0)             # (TB, H)
    alpha_g = jax.nn.sigmoid(jnp.sum(h * dw, axis=1, keepdims=True) + scal_ref[0])  # (TB, 1)

    # 3) weighted fusion: a*fg + (1-a)*fl == fl + a*(fg - fl)
    f_fused = fl + alpha_g * (fg - fl)            # (TB, Cin)

    # 4) 1x1 conv (NCHW, H=W=1) == channel matmul + bias.  bf16 operands, f32 accumulate.
    f1 = jnp.dot(f_fused.astype(wc_ref.dtype), wc_ref[...],
                 preferred_element_type=jnp.float32) + bc_ref[...]        # (TB, Cout_pad)

    # 5a) CBAM channel attention: avg-pool == max-pool == f1 on a 1x1 map, so the logit is
    #     2 * mlp(f1); the factor 2 is folded into wca2 in the wrapper.
    ca_h = jnp.maximum(jnp.dot(f1.astype(wca1_ref.dtype), wca1_ref[...],
                               preferred_element_type=jnp.float32), 0.0)  # (TB, r_pad)
    ca = jax.nn.sigmoid(jnp.dot(ca_h.astype(wca2_ref.dtype), wca2_ref[...],
                                preferred_element_type=jnp.float32))      # (TB, Cout_pad)
    f_ca = f1 * ca

    # 5b) CBAM spatial attention: 7x7 conv on a 1x1 [mean_c, max_c] map -> centre tap only.
    if cout == cout_pad:
        mean_c = jnp.mean(f_ca, axis=1, keepdims=True)
        max_c = jnp.max(f_ca, axis=1, keepdims=True)
    else:  # padded lanes are excluded from the channel pools
        lane = jax.lax.broadcasted_iota(jnp.int32, f_ca.shape, 1)
        valid = lane < cout
        mean_c = jnp.sum(jnp.where(valid, f_ca, 0.0), axis=1, keepdims=True) / cout
        max_c = jnp.max(jnp.where(valid, f_ca, -jnp.inf), axis=1, keepdims=True)
    sa = jax.nn.sigmoid(mean_c * scal_ref[1] + max_c * scal_ref[2])       # (TB, 1)

    out_ref[...] = (f_ca * sa).astype(out_ref.dtype)


def feature_fusion(F_g, F_l, params, *, block_b=None,
                   mxu_dtype=jnp.bfloat16, io_dtype=jnp.bfloat16):
    """Pallas TPU implementation of FeatureFusion.forward (channel-last (B, C) layout).

    io_dtype controls the HBM streaming precision of F_g / F_l / output (bf16 by default:
    the kernel is HBM-bandwidth-bound, all fusion math is still f32 in VMEM)."""
    B, Cin = F_g.shape
    H = params["w1"].shape[1]
    Cout = params["wc"].shape[1]
    r = params["wca1"].shape[1]

    # --- batch tile: >= 2 grid steps when possible (v7x megacore), tiles as deep as
    #     reasonable (>=256 rows fills the v6e/v7x 256-wide MXU M dim for large B), cap 1024.
    if block_b is None:
        block_b = min(1024, max(8, _round_up(pl.cdiv(B, 2), 8)))
    else:
        block_b = max(8, _round_up(block_b, 8))
    grid = (pl.cdiv(B, block_b),)   # ragged trailing tile is clipped by Pallas; no pad copy

    # --- stream activations / output at reduced precision
    if F_g.dtype != io_dtype:
        F_g = F_g.astype(io_dtype)
    if F_l.dtype != io_dtype:
        F_l = F_l.astype(io_dtype)

    # --- gate rewrite: softmax([l0, l1])[0] == sigmoid(l0 - l1) ---
    dw = (params["w2"][:, 0] - params["w2"][:, 1]).reshape(1, H)
    db = params["b2"][0, 0] - params["b2"][0, 1]
    gate = jnp.concatenate([params["w1"], params["b1"], dw], axis=0).astype(jnp.float32)   # (3, H)
    scalars = jnp.stack(
        [db, params["wsa"][0, 0], params["wsa"][0, 1]]).astype(jnp.float32)                # (3,)

    # --- lane-dense weights: pad Cout and the CBAM bottleneck to multiples of 128 ---
    Cout_pad = _round_up(Cout, 128)
    r_pad = _round_up(r, 128)
    wc = jnp.pad(params["wc"], ((0, 0), (0, Cout_pad - Cout))).astype(mxu_dtype)           # (Cin, Cout_pad)
    bc = jnp.pad(params["bc"], ((0, 0), (0, Cout_pad - Cout))).astype(jnp.float32)         # (1, Cout_pad)
    wca1 = jnp.pad(params["wca1"],
                   ((0, Cout_pad - Cout), (0, r_pad - r))).astype(mxu_dtype)               # (Cout_pad, r_pad)
    wca2 = jnp.pad(2.0 * params["wca2"],            # CBAM 2x folded here (exact in bf16)
                   ((0, r_pad - r), (0, Cout_pad - Cout))).astype(mxu_dtype)               # (r_pad, Cout_pad)

    # --- size the VMEM request from the real footprint (never request all of v7x's 64 MiB) ---
    io_bytes = jnp.dtype(io_dtype).itemsize
    w_bytes = jnp.dtype(mxu_dtype).itemsize
    vmem_need = (
        2 * 2 * block_b * Cin * io_bytes                       # F_g + F_l, double-buffered
        + 2 * block_b * Cout_pad * io_bytes                    # out, double-buffered
        + 3 * H * 4 + Cout_pad * 4                             # gate vectors + bias (single buf)
        + (Cin * Cout_pad + 2 * Cout_pad * r_pad) * w_bytes    # wc, wca1, wca2 (single buf)
    )
    vmem_limit = int(min(48 * 1024 * 1024, max(16 * 1024 * 1024, 2 * vmem_need)))

    kern = functools.partial(fusion_kernel, cout=Cout, cout_pad=Cout_pad)
    resident = dict(pipeline_mode=pl.Buffered(1))   # weights: fetched once, single VMEM buffer

    out = pl.pallas_call(
        kern,
        out_shape=jax.ShapeDtypeStruct((B, Cout_pad), io_dtype),
        grid=grid,
        in_specs=[
            pl.BlockSpec(memory_space=pltpu.MemorySpace.SMEM),              # scalars (3,)
            pl.BlockSpec((block_b, Cin), lambda i: (i, 0)),                 # F_g  (batch-tiled)
            pl.BlockSpec((block_b, Cin), lambda i: (i, 0)),                 # F_l  (batch-tiled)
            pl.BlockSpec((3, H), lambda i: (0, 0), **resident),             # gate vectors
            pl.BlockSpec((Cin, Cout_pad), lambda i: (0, 0), **resident),    # wc
            pl.BlockSpec((1, Cout_pad), lambda i: (0, 0), **resident),      # bc
            pl.BlockSpec((Cout_pad, r_pad), lambda i: (0, 0), **resident),  # wca1
            pl.BlockSpec((r_pad, Cout_pad), lambda i: (0, 0), **resident),  # wca2
        ],
        out_specs=pl.BlockSpec((block_b, Cout_pad), lambda i: (i, 0)),
        compiler_params=pltpu.CompilerParams(
            dimension_semantics=("parallel",),
            vmem_limit_bytes=vmem_limit,
        ),
    )(scalars, F_g, F_l, gate, wc, bc, wca1, wca2)

    return out if Cout_pad == Cout else out[:, :Cout]


def feature_fusion_ref(F_g, F_l, p, mxu_dtype=jnp.bfloat16):
    """Pure-JAX reference mirroring the PyTorch forward (with the assumed CBAM),
    with matmul operands cast to the same MXU dtype as the kernel."""
    s = jnp.sum(F_g * F_l, axis=1, keepdims=True)
    h = jax.nn.relu(s * p["w1"] + p["b1"])
    alpha = jax.nn.softmax(h @ p["w2"] + p["b2"], axis=1)
    f_fused = alpha[:, 0:1] * F_g + alpha[:, 1:2] * F_l
    f1 = jnp.dot(f_fused.astype(mxu_dtype), p["wc"].astype(mxu_dtype),
                 preferred_element_type=jnp.float32) + p["bc"]
    ca_h = jax.nn.relu(jnp.dot(f1.astype(mxu_dtype), p["wca1"].astype(mxu_dtype),
                               preferred_element_type=jnp.float32))
    ca = jax.nn.sigmoid(2.0 * jnp.dot(ca_h.astype(mxu_dtype), p["wca2"].astype(mxu_dtype),
                                      preferred_element_type=jnp.float32))
    f_ca = f1 * ca
    mean_c = jnp.mean(f_ca, axis=1, keepdims=True)
    max_c = jnp.max(f_ca, axis=1, keepdims=True)
    sa = jax.nn.sigmoid(mean_c * p["wsa"][:, 0:1] + max_c * p["wsa"][:, 1:2])
    return f_ca * sa


def make_params(key, in_channels, hidden_dim, out_channels, reduction):
    ks = jax.random.split(key, 8)
    r = out_channels // reduction
    scale = 0.1
    return {
        # MLP: Linear(1 -> H), Linear(H -> 2)   (weights stored transposed for x @ W)
        "w1": scale * jax.random.normal(ks[0], (1, hidden_dim), jnp.float32),
        "b1": scale * jax.random.normal(ks[1], (1, hidden_dim), jnp.float32),
        "w2": scale * jax.random.normal(ks[2], (hidden_dim, 2), jnp.float32),
        "b2": scale * jax.random.normal(ks[3], (1, 2), jnp.float32),
        # 1x1 conv: (Cin, Cout) + bias
        "wc": scale * jax.random.normal(ks[4], (in_channels, out_channels), jnp.float32),
        "bc": scale * jax.random.normal(ks[5], (1, out_channels), jnp.float32),
        # CBAM channel-attention shared MLP (bias-free): (Cout, Cout/r), (Cout/r, Cout)
        "wca1": scale * jax.random.normal(ks[6], (out_channels, r), jnp.float32),
        "wca2": scale * jax.random.normal(ks[7], (r, out_channels), jnp.float32),
        # CBAM spatial-attention 7x7 conv centre tap for the [mean, max] channels
        "wsa": jnp.array([[0.3, -0.2]], jnp.float32),
    }


if __name__ == "__main__":
    B, Cin, H, Cout, red = 16, 128, 32, 128, 16
    key = jax.random.PRNGKey(0)
    k_g, k_l, k_p = jax.random.split(key, 3)
    F_g = jax.random.normal(k_g, (B, Cin), jnp.float32)
    F_l = jax.random.normal(k_l, (B, Cin), jnp.float32)
    params = make_params(k_p, Cin, H, Cout, red)

    # default tiling: block_b=8, grid=(2,) -> exercises batch tiling + resident weights
    out = jax.block_until_ready(feature_fusion(F_g, F_l, params))
    assert out.shape == (B, Cout)

    # reference fed with the same bf16-rounded inputs the kernel streams
    ref = feature_fusion_ref(F_g.astype(jnp.bfloat16).astype(jnp.float32),
                             F_l.astype(jnp.bfloat16).astype(jnp.float32), params)
    err = float(jnp.max(jnp.abs(out.astype(jnp.float32) - ref)))
    assert err < 3e-2, f"mismatch vs JAX reference (max abs err {err})"

    # ragged batch (B % block_b != 0): exercises the no-pad clipped trailing tile path
    B2 = 20
    F_g2 = jax.random.normal(jax.random.PRNGKey(1), (B2, Cin), jnp.float32)
    F_l2 = jax.random.normal(jax.random.PRNGKey(2), (B2, Cin), jnp.float32)
    out2 = jax.block_until_ready(feature_fusion(F_g2, F_l2, params, block_b=16))
    ref2 = feature_fusion_ref(F_g2.astype(jnp.bfloat16).astype(jnp.float32),
                              F_l2.astype(jnp.bfloat16).astype(jnp.float32), params)
    err2 = float(jnp.max(jnp.abs(out2.astype(jnp.float32) - ref2)))
    assert out2.shape == (B2, Cout) and err2 < 3e-2, f"ragged-tile mismatch (max abs err {err2})"

    print("KERNEL_OK")
</pallas_src>

<mosaic_0001>
module attributes {stable_mosaic.version = 11 : i64} {
  func.func @fusion_kernel(%arg0: i32, %arg1: memref<3xf32, #tpu.memory_space<smem>>, %arg2: memref<8x128xbf16, #tpu.memory_space<vmem>>, %arg3: memref<8x128xbf16, #tpu.memory_space<vmem>>, %arg4: memref<3x32xf32, #tpu.memory_space<vmem>>, %arg5: memref<128x128xbf16, #tpu.memory_space<vmem>>, %arg6: memref<1x128xf32, #tpu.memory_space<vmem>>, %arg7: memref<128x128xbf16, #tpu.memory_space<vmem>>, %arg8: memref<128x128xbf16, #tpu.memory_space<vmem>>, %arg9: memref<8x128xbf16, #tpu.memory_space<vmem>>) attributes {dimension_semantics = [#tpu.dimension_semantics<parallel>], iteration_bounds = array<i64: 2>, scalar_prefetch = 0 : i64, scratch_operands = 0 : i64, tpu.core_type = #tpu.core_type<tc>, window_params = [{transform_indices = @transform_0, window_bounds = array<i64: 3>}, {transform_indices = @transform_1, window_bounds = array<i64: 8, 128>}, {transform_indices = @transform_2, window_bounds = array<i64: 8, 128>}, {pipeline_mode = #tpu.pipeline_mode<synchronous>, transform_indices = @transform_3, window_bounds = array<i64: 3, 32>}, {pipeline_mode = #tpu.pipeline_mode<synchronous>, transform_indices = @transform_4, window_bounds = array<i64: 128, 128>}, {pipeline_mode = #tpu.pipeline_mode<synchronous>, transform_indices = @transform_5, window_bounds = array<i64: 1, 128>}, {pipeline_mode = #tpu.pipeline_mode<synchronous>, transform_indices = @transform_6, window_bounds = array<i64: 128, 128>}, {pipeline_mode = #tpu.pipeline_mode<synchronous>, transform_indices = @transform_7, window_bounds = array<i64: 128, 128>}, {transform_indices = @transform_8, window_bounds = array<i64: 8, 128>}]} {
    %c0 = arith.constant 0 : index
    %c0_0 = arith.constant 0 : index
    %0 = vector.load %arg2[%c0, %c0_0] : memref<8x128xbf16, #tpu.memory_space<vmem>>, vector<8x128xbf16>
    %1 = arith.extf %0 : vector<8x128xbf16> to vector<8x128xf32>
    %c0_1 = arith.constant 0 : index
    %c0_2 = arith.constant 0 : index
    %2 = vector.load %arg3[%c0_1, %c0_2] : memref<8x128xbf16, #tpu.memory_space<vmem>>, vector<8x128xbf16>
    %3 = arith.extf %2 : vector<8x128xbf16> to vector<8x128xf32>
    %4 = arith.mulf %1, %3 : vector<8x128xf32>
    %cst = arith.constant dense<0.000000e+00> : vector<8xf32>
    %5 = vector.multi_reduction <add>, %4, %cst [1] : vector<8x128xf32> to vector<8xf32>
    %6 = vector.shape_cast %5 : vector<8xf32> to vector<8x1xf32>
    %c0_3 = arith.constant 0 : index
    %c0_4 = arith.constant 0 : index
    %7 = vector.load %arg4[%c0_3, %c0_4] : memref<3x32xf32, #tpu.memory_space<vmem>>, vector<1x32xf32>
    %c1 = arith.constant 1 : index
    %c0_5 = arith.constant 0 : index
    %8 = vector.load %arg4[%c1, %c0_5] : memref<3x32xf32, #tpu.memory_space<vmem>>, vector<1x32xf32>
    %c2 = arith.constant 2 : index
    %c0_6 = arith.constant 0 : index
    %9 = vector.load %arg4[%c2, %c0_6] : memref<3x32xf32, #tpu.memory_space<vmem>>, vector<1x32xf32>
    %10 = vector.broadcast %6 : vector<8x1xf32> to vector<8x32xf32>
    %11 = vector.broadcast %7 : vector<1x32xf32> to vector<8x32xf32>
    %12 = arith.mulf %10, %11 : vector<8x32xf32>
    %13 = vector.broadcast %8 : vector<1x32xf32> to vector<8x32xf32>
    %14 = arith.addf %12, %13 : vector<8x32xf32>
    %cst_7 = arith.constant 0.000000e+00 : f32
    %15 = vector.broadcast %cst_7 : f32 to vector<8x32xf32>
    %16 = arith.maximumf %14, %15 : vector<8x32xf32>
    %17 = vector.broadcast %9 : vector<1x32xf32> to vector<8x32xf32>
    %18 = arith.mulf %16, %17 : vector<8x32xf32>
    %cst_8 = arith.constant dense<0.000000e+00> : vector<8xf32>
    %19 = vector.multi_reduction <add>, %18, %cst_8 [1] : vector<8x32xf32> to vector<8xf32>
    %20 = vector.shape_cast %19 : vector<8xf32> to vector<8x1xf32>
    %c0_9 = arith.constant 0 : index
    %21 = memref.load %arg1[%c0_9] : memref<3xf32, #tpu.memory_space<smem>>
    %22 = vector.broadcast %21 : f32 to vector<8x1xf32>
    %23 = arith.addf %20, %22 : vector<8x1xf32>
    %24 = arith.negf %23 : vector<8x1xf32>
    %25 = math.exp %24 : vector<8x1xf32>
    %cst_10 = arith.constant 1.000000e+00 : f32
    %26 = vector.broadcast %cst_10 : f32 to vector<8x1xf32>
    %27 = arith.addf %26, %25 : vector<8x1xf32>
    %28 = arith.divf %26, %27 : vector<8x1xf32>
    %29 = arith.subf %1, %3 : vector<8x128xf32>
    %30 = vector.broadcast %28 : vector<8x1xf32> to vector<8x128xf32>
    %31 = arith.mulf %30, %29 : vector<8x128xf32>
    %32 = arith.addf %3, %31 : vector<8x128xf32>
    %33 = arith.truncf %32 : vector<8x128xf32> to vector<8x128xbf16>
    %c0_11 = arith.constant 0 : index
    %c0_12 = arith.constant 0 : index
    %34 = vector.load %arg5[%c0_11, %c0_12] : memref<128x128xbf16, #tpu.memory_space<vmem>>, vector<128x128xbf16>
    %cst_13 = arith.constant dense<0.000000e+00> : vector<8x128xf32>
    %35 = tpu.matmul %33, %34, %cst_13 {dimension_numbers = #tpu.dot_dimension_numbers<[1], [0], [0], [1], [0, 0, 1, 1], [], []>} : vector<8x128xbf16>, vector<128x128xbf16>, vector<8x128xf32> -> vector<8x128xf32>
    %c0_14 = arith.constant 0 : index
    %c0_15 = arith.constant 0 : index
    %36 = vector.load %arg6[%c0_14, %c0_15] : memref<1x128xf32, #tpu.memory_space<vmem>>, vector<1x128xf32>
    %37 = vector.broadcast %36 : vector<1x128xf32> to vector<8x128xf32>
    %38 = arith.addf %35, %37 : vector<8x128xf32>
    %39 = arith.truncf %38 : vector<8x128xf32> to vector<8x128xbf16>
    %c0_16 = arith.constant 0 : index
    %c0_17 = arith.constant 0 : index
    %40 = vector.load %arg7[%c0_16, %c0_17] : memref<128x128xbf16, #tpu.memory_space<vmem>>, vector<128x128xbf16>
    %cst_18 = arith.constant dense<0.000000e+00> : vector<8x128xf32>
    %41 = tpu.matmul %39, %40, %cst_18 {dimension_numbers = #tpu.dot_dimension_numbers<[1], [0], [0], [1], [0, 0, 1, 1], [], []>} : vector<8x128xbf16>, vector<128x128xbf16>, vector<8x128xf32> -> vector<8x128xf32>
    %cst_19 = arith.constant 0.000000e+00 : f32
    %42 = vector.broadcast %cst_19 : f32 to vector<8x128xf32>
    %43 = arith.maximumf %41, %42 : vector<8x128xf32>
    %44 = arith.truncf %43 : vector<8x128xf32> to vector<8x128xbf16>
    %c0_20 = arith.constant 0 : index
    %c0_21 = arith.constant 0 : index
    %45 = vector.load %arg8[%c0_20, %c0_21] : memref<128x128xbf16, #tpu.memory_space<vmem>>, vector<128x128xbf16>
    %cst_22 = arith.constant dense<0.000000e+00> : vector<8x128xf32>
    %46 = tpu.matmul %44, %45, %cst_22 {dimension_numbers = #tpu.dot_dimension_numbers<[1], [0], [0], [1], [0, 0, 1, 1], [], []>} : vector<8x128xbf16>, vector<128x128xbf16>, vector<8x128xf32> -> vector<8x128xf32>
    %47 = arith.negf %46 : vector<8x128xf32>
    %48 = math.exp %47 : vector<8x128xf32>
    %cst_23 = arith.constant 1.000000e+00 : f32
    %49 = vector.broadcast %cst_23 : f32 to vector<8x128xf32>
    %50 = arith.addf %49, %48 : vector<8x128xf32>
    %51 = arith.divf %49, %50 : vector<8x128xf32>
    %52 = arith.mulf %38, %51 : vector<8x128xf32>
    %cst_24 = arith.constant dense<0.000000e+00> : vector<8xf32>
    %53 = vector.multi_reduction <add>, %52, %cst_24 [1] : vector<8x128xf32> to vector<8xf32>
    %54 = vector.shape_cast %53 : vector<8xf32> to vector<8x1xf32>
    %cst_25 = arith.constant 1.280000e+02 : f32
    %55 = vector.broadcast %cst_25 : f32 to vector<8x1xf32>
    %56 = arith.divf %54, %55 : vector<8x1xf32>
    %cst_26 = arith.constant dense<0xFF800000> : vector<8xf32>
    %57 = vector.multi_reduction <maximumf>, %52, %cst_26 [1] : vector<8x128xf32> to vector<8xf32>
    %58 = vector.shape_cast %57 : vector<8xf32> to vector<8x1xf32>
    %c1_27 = arith.constant 1 : index
    %59 = memref.load %arg1[%c1_27] : memref<3xf32, #tpu.memory_space<smem>>
    %60 = vector.broadcast %59 : f32 to vector<8x1xf32>
    %61 = arith.mulf %56, %60 : vector<8x1xf32>
    %c2_28 = arith.constant 2 : index
    %62 = memref.load %arg1[%c2_28] : memref<3xf32, #tpu.memory_space<smem>>
    %63 = vector.broadcast %62 : f32 to vector<8x1xf32>
    %64 = arith.mulf %58, %63 : vector<8x1xf32>
    %65 = arith.addf %61, %64 : vector<8x1xf32>
    %66 = arith.negf %65 : vector<8x1xf32>
    %67 = math.exp %66 : vector<8x1xf32>
    %cst_29 = arith.constant 1.000000e+00 : f32
    %68 = vector.broadcast %cst_29 : f32 to vector<8x1xf32>
    %69 = arith.addf %68, %67 : vector<8x1xf32>
    %70 = arith.divf %68, %69 : vector<8x1xf32>
    %71 = vector.broadcast %70 : vector<8x1xf32> to vector<8x128xf32>
    %72 = arith.mulf %52, %71 : vector<8x128xf32>
    %73 = arith.truncf %72 : vector<8x128xf32> to vector<8x128xbf16>
    %c0_30 = arith.constant 0 : index
    %c0_31 = arith.constant 0 : index
    %74 = vector.load %arg9[%c0_30, %c0_31] : memref<8x128xbf16, #tpu.memory_space<vmem>>, vector<8x128xbf16>
    tpu.vector_store %arg9[%c0_30, %c0_31], %73 {strides = array<i32>} : memref<8x128xbf16, #tpu.memory_space<vmem>>, vector<8x128xbf16>,
    return
  }
  func.func @transform_0(%arg0: i32) -> i32 {
    %c0_i32 = arith.constant 0 : i32
    %c0_i32_0 = arith.constant 0 : i32
    return %c0_i32 : i32
  }
  func.func @transform_1(%arg0: i32) -> (i32, i32) {
    %c0_i32 = arith.constant 0 : i32
    %c0_i32_0 = arith.constant 0 : i32
    return %arg0, %c0_i32 : i32, i32
  }
  func.func @transform_2(%arg0: i32) -> (i32, i32) {
    %c0_i32 = arith.constant 0 : i32
    %c0_i32_0 = arith.constant 0 : i32
    return %arg0, %c0_i32 : i32, i32
  }
  func.func @transform_3(%arg0: i32) -> (i32, i32) {
    %c0_i32 = arith.constant 0 : i32
    %c0_i32_0 = arith.constant 0 : i32
    %c0_i32_1 = arith.constant 0 : i32
    return %c0_i32, %c0_i32_0 : i32, i32
  }
  func.func @transform_4(%arg0: i32) -> (i32, i32) {
    %c0_i32 = arith.constant 0 : i32
    %c0_i32_0 = arith.constant 0 : i32
    %c0_i32_1 = arith.constant 0 : i32
    return %c0_i32, %c0_i32_0 : i32, i32
  }
  func.func @transform_5(%arg0: i32) -> (i32, i32) {
    %c0_i32 = arith.constant 0 : i32
    %c0_i32_0 = arith.constant 0 : i32
    %c0_i32_1 = arith.constant 0 : i32
    return %c0_i32, %c0_i32_0 : i32, i32
  }
  func.func @transform_6(%arg0: i32) -> (i32, i32) {
    %c0_i32 = arith.constant 0 : i32
    %c0_i32_0 = arith.constant 0 : i32
    %c0_i32_1 = arith.constant 0 : i32
    return %c0_i32, %c0_i32_0 : i32, i32
  }
  func.func @transform_7(%arg0: i32) -> (i32, i32) {
    %c0_i32 = arith.constant 0 : i32
    %c0_i32_0 = arith.constant 0 : i32
    %c0_i32_1 = arith.constant 0 : i32
    return %c0_i32, %c0_i32_0 : i32, i32
  }
  func.func @transform_8(%arg0: i32) -> (i32, i32) {
    %c0_i32 = arith.constant 0 : i32
    %c0_i32_0 = arith.constant 0 : i32
    return %arg0, %c0_i32 : i32, i32
  }
}

</mosaic_0001>

<llo_original>
// kernel: tpu_custom_call.1
$region0: #{tpu_custom_call.1}
  #allocation0 [shape = 'u32[]', space=smem, size = 0x4, offset = 0x4, fixed_abs, tag = 'smem constant byte address 0x4 - core index']
  #allocation1 [shape = 'u32[144,128]{1,0:T(1,128)}', space=vmem, size = 0x12000, scoped, tag = 'internal scratch']
  %s0 = inlined_call_operand.hbm [shape: f32[3], index: 0, kind: input, shape index: {}]
  %s1 = inlined_call_operand.hbm [shape: bf16[16,128], index: 1, kind: input, shape index: {}]
  %s2 = inlined_call_operand.hbm [shape: bf16[16,128], index: 2, kind: input, shape index: {}]
  %s3 = inlined_call_operand.vmem [shape: f32[3,32], index: 3, kind: input, shape index: {}]
  %s4 = inlined_call_operand.hbm [shape: bf16[128,128], index: 4, kind: input, shape index: {}]
  %s5 = inlined_call_operand.vmem [shape: f32[1,128], index: 5, kind: input, shape index: {}]
  %s6 = inlined_call_operand.hbm [shape: bf16[128,128], index: 6, kind: input, shape index: {}]
  %s7 = inlined_call_operand.hbm [shape: bf16[128,128], index: 7, kind: input, shape index: {}]
  %s8 = inlined_call_operand.hbm [shape: bf16[16,128], index: 8, kind: output, shape index: {}]
  %s9 = sld [smem:[#allocation0]]
  $region89: #{tpu_custom_call.1} parent=0
    _
  %s11 = ssub.s32 1, %s9
  %s12 = scalar_select 0, %s11, %s9
  $region1: #{tpu_custom_call.1} parent=0
    #allocation2 [shape = 'u8[512]{0}', space=smem, size = 0x200, scoped, tag = 'input window, operand 0, single buffered']
    #allocation3 [shape = 's32[2]{0}', space=sflag, size = 0x8, scoped, tag = 'scoped memory for tpu_custom_call.1']
    #allocation4 [shape = 's32[2]{0}', space=sflag, size = 0x8, scoped, tag = 'scoped memory for tpu_custom_call.1']
    #allocation5 [shape = 's32[2]{0}', space=sflag, size = 0x8, scoped, tag = 'scoped memory for tpu_custom_call.1']
    #allocation6 [shape = 'u8[4096]{0}', space=vmem, size = 0x1000, scoped, tag = 'input window, operand 1']
    #allocation7 [shape = 'u8[4096]{0}', space=vmem, size = 0x1000, scoped, tag = 'input window, operand 2']
    #allocation8 [shape = 's32[2]{0}', space=sflag, size = 0x8, scoped, tag = 'scoped memory for tpu_custom_call.1']
    #allocation9 [shape = 'u8[32768]{0}', space=vmem, size = 0x8000, scoped, tag = 'input window, operand 4, single buffered']
    #allocation10 [shape = 'u8[32768]{0}', space=vmem, size = 0x8000, scoped, tag = 'input window, operand 6, single buffered']
    #allocation11 [shape = 's32[1]{0}', space=sflag, size = 0x4, scoped, tag = 'scoped memory for tpu_custom_call.1']
    #allocation12 [shape = 'u8[32768]{0}', space=vmem, size = 0x8000, scoped, tag = 'input window, operand 7, single buffered']
    #allocation13 [shape = 'u8[4096]{0}', space=vmem, size = 0x1000, scoped, tag = 'output window, operand 0']
    %13 = vsyncpa [#allocation5], 0
    %14 = vsyncpa [#allocation3], 0
    %s15 = scalar_lea.sflag [#allocation3], 1
    %16 = vsyncpa %s15, 0
    %17 = vsyncpa [#allocation8], 0
    %s18 = scalar_lea.sflag [#allocation8], 1
    %19 = vsyncpa %s18, 0
    %20 = vsyncpa [#allocation11], 0
    %21 = vsyncpa [#allocation4], 0
    %s22 = scalar_lea.sflag [#allocation4], 1
    %23 = vsyncpa %s22, 0
    loop: start=0, step=1, limit=4
    $region2: #{tpu_custom_call.1} parent=1 // loop_pre_header
      _
    $region3: #{tpu_custom_call.1} parent=1 // loop_header
      %s25 = sphi 0, %s29
      %p26 = scmp.ge.s32.totalorder %s25, 4
      %s33 = sphi 0, %s33
      %s35 = sphi 0, %s33
      %s36 = sphi 0, %s35
      %s50 = sphi 0, %s36
      %s56 = sphi 0, %s58
      %s59 = sphi 0, %s56
      %s60 = sphi 0, %s59
      %s76 = sphi 0, %s60
      %s82 = sphi 0, %s84
      %s85 = sphi 0, %s82
      %s86 = sphi 0, %s85
      %s102 = sphi 0, %s86
      %s106 = sphi 0, %s106
      %s108 = sphi 0, %s106
      %s109 = sphi 0, %s108
      %s123 = sphi 0, %s109
      %s127 = sphi 0, %s127
      %s129 = sphi 0, %s127
      %s130 = sphi 0, %s129
      %s144 = sphi 0, %s130
      %s148 = sphi 0, %s148
      %s150 = sphi 0, %s148
      %s151 = sphi 0, %s150
      %s165 = sphi 0, %s151
      %s169 = sphi 0, %s169
      %s171 = sphi 0, %s169
      %s172 = sphi 0, %s171
      %s186 = sphi 0, %s172
      %s190 = sphi 0, %s190
      %s192 = sphi 0, %s190
      %s193 = sphi 0, %s192
      %s207 = sphi 0, %s193
      %s213 = sphi 0, %s215
      %s216 = sphi 0, %s213
      %s217 = sphi 0, %s216
      %s233 = sphi 0, %s217
    $region4: #{tpu_custom_call.1} parent=1 // loop_header_branch
      %28 = sbr.rel (%p26) target = $region8
    $region5: #{tpu_custom_call.1} parent=1 // loop_body
      %s30 = ssub.s32 %s25, 1
      %s31 = ssub.s32 %s25, 2
      %s32 = sadd.s32 %s25, 1
      %s34 = sadd.s32 %s33, 1
      %p37 = scmp.eq.s32.totalorder %s25, 1
      %p38 = scmp.ne.s32.totalorder %s33, %s35
      %p39 = scmp.eq.s32.totalorder %s25, 0
      %p40 = por %p38, %p39
      %p41 = scmp.ne.s32.totalorder %s33, %s35
      %p42 = scmp.eq.s32.totalorder %s30, 1
      %p43 = por %p41, %p42
      %p44 = scmp.ne.s32.totalorder %s35, %s36
      %p45 = scmp.eq.s32.totalorder %s30, 0
      %p46 = por %p44, %p45
      %p47 = scmp.ne.s32.totalorder %s35, %s36
      %p48 = scmp.eq.s32.totalorder %s31, 1
      %p49 = por %p47, %p48
      %p51 = scmp.ne.s32.totalorder %s36, %s50
      %p52 = scmp.eq.s32.totalorder %s31, 0
      %p53 = por %p51, %p52
      %s54 = ssub.s32 %s25, %s32
      %p55 = scmp.eq.s32.totalorder %s54, 0
      %s57 = sadd.s32 %s56, 1
      %s58 = scalar_select %p55, %s56, %s57
      %p61 = pneg %p55
      %p62 = scmp.eq.s32.totalorder %s25, 1
      %p63 = por %p61, %p62
      %p64 = scmp.ne.s32.totalorder %s56, %s59
      %p65 = scmp.eq.s32.totalorder %s25, 0
      %p66 = por %p64, %p65
      %p67 = scmp.ne.s32.totalorder %s56, %s59
      %p68 = scmp.eq.s32.totalorder %s30, 1
      %p69 = por %p67, %p68
      %p70 = scmp.ne.s32.totalorder %s59, %s60
      %p71 = scmp.eq.s32.totalorder %s30, 0
      %p72 = por %p70, %p71
      %p73 = scmp.ne.s32.totalorder %s59, %s60
      %p74 = scmp.eq.s32.totalorder %s31, 1
      %p75 = por %p73, %p74
      %p77 = scmp.ne.s32.totalorder %s60, %s76
      %p78 = scmp.eq.s32.totalorder %s31, 0
      %p79 = por %p77, %p78
      %s80 = ssub.s32 %s25, %s32
      %p81 = scmp.eq.s32.totalorder %s80, 0
      %s83 = sadd.s32 %s82, 1
      %s84 = scalar_select %p81, %s82, %s83
      %p87 = pneg %p81
      %p88 = scmp.eq.s32.totalorder %s25, 1
      %p89 = por %p87, %p88
      %p90 = scmp.ne.s32.totalorder %s82, %s85
      %p91 = scmp.eq.s32.totalorder %s25, 0
      %p92 = por %p90, %p91
      %p93 = scmp.ne.s32.totalorder %s82, %s85
      %p94 = scmp.eq.s32.totalorder %s30, 1
      %p95 = por %p93, %p94
      %p96 = scmp.ne.s32.totalorder %s85, %s86
      %p97 = scmp.eq.s32.totalorder %s30, 0
      %p98 = por %p96, %p97
      %p99 = scmp.ne.s32.totalorder %s85, %s86
      %p100 = scmp.eq.s32.totalorder %s31, 1
      %p101 = por %p99, %p100
      %p103 = scmp.ne.s32.totalorder %s86, %s102
      %p104 = scmp.eq.s32.totalorder %s31, 0
      %p105 = por %p103, %p104
      %s107 = sadd.s32 %s106, 1
      %p110 = scmp.eq.s32.totalorder %s25, 1
      %p111 = scmp.ne.s32.totalorder %s106, %s108
      %p112 = scmp.eq.s32.totalorder %s25, 0
      %p113 = por %p111, %p112
      %p114 = scmp.ne.s32.totalorder %s106, %s108
      %p115 = scmp.eq.s32.totalorder %s30, 1
      %p116 = por %p114, %p115
      %p117 = scmp.ne.s32.totalorder %s108, %s109
      %p118 = scmp.eq.s32.totalorder %s30, 0
      %p119 = por %p117, %p118
      %p120 = scmp.ne.s32.totalorder %s108, %s109
      %p121 = scmp.eq.s32.totalorder %s31, 1
      %p122 = por %p120, %p121
      %p124 = scmp.ne.s32.totalorder %s109, %s123
      %p125 = scmp.eq.s32.totalorder %s31, 0
      %p126 = por %p124, %p125
      %s128 = sadd.s32 %s127, 1
      %p131 = scmp.eq.s32.totalorder %s25, 1
      %p132 = scmp.ne.s32.totalorder %s127, %s129
      %p133 = scmp.eq.s32.totalorder %s25, 0
      %p134 = por %p132, %p133
      %p135 = scmp.ne.s32.totalorder %s127, %s129
      %p136 = scmp.eq.s32.totalorder %s30, 1
      %p137 = por %p135, %p136
      %p138 = scmp.ne.s32.totalorder %s129, %s130
      %p139 = scmp.eq.s32.totalorder %s30, 0
      %p140 = por %p138, %p139
      %p141 = scmp.ne.s32.totalorder %s129, %s130
      %p142 = scmp.eq.s32.totalorder %s31, 1
      %p143 = por %p141, %p142
      %p145 = scmp.ne.s32.totalorder %s130, %s144
      %p146 = scmp.eq.s32.totalorder %s31, 0
      %p147 = por %p145, %p146
      %s149 = sadd.s32 %s148, 1
      %p152 = scmp.eq.s32.totalorder %s25, 1
      %p153 = scmp.ne.s32.totalorder %s148, %s150
      %p154 = scmp.eq.s32.totalorder %s25, 0
      %p155 = por %p153, %p154
      %p156 = scmp.ne.s32.totalorder %s148, %s150
      %p157 = scmp.eq.s32.totalorder %s30, 1
      %p158 = por %p156, %p157
      %p159 = scmp.ne.s32.totalorder %s150, %s151
      %p160 = scmp.eq.s32.totalorder %s30, 0
      %p161 = por %p159, %p160
      %p162 = scmp.ne.s32.totalorder %s150, %s151
      %p163 = scmp.eq.s32.totalorder %s31, 1
      %p164 = por %p162, %p163
      %p166 = scmp.ne.s32.totalorder %s151, %s165
      %p167 = scmp.eq.s32.totalorder %s31, 0
      %p168 = por %p166, %p167
      %s170 = sadd.s32 %s169, 1
      %p173 = scmp.eq.s32.totalorder %s25, 1
      %p174 = scmp.ne.s32.totalorder %s169, %s171
      %p175 = scmp.eq.s32.totalorder %s25, 0
      %p176 = por %p174, %p175
      %p177 = scmp.ne.s32.totalorder %s169, %s171
      %p178 = scmp.eq.s32.totalorder %s30, 1
      %p179 = por %p177, %p178
      %p180 = scmp.ne.s32.totalorder %s171, %s172
      %p181 = scmp.eq.s32.totalorder %s30, 0
      %p182 = por %p180, %p181
      %p183 = scmp.ne.s32.totalorder %s171, %s172
      %p184 = scmp.eq.s32.totalorder %s31, 1
      %p185 = por %p183, %p184
      %p187 = scmp.ne.s32.totalorder %s172, %s186
      %p188 = scmp.eq.s32.totalorder %s31, 0
      %p189 = por %p187, %p188
      %s191 = sadd.s32 %s190, 1
      %p194 = scmp.eq.s32.totalorder %s25, 1
      %p195 = scmp.ne.s32.totalorder %s190, %s192
      %p196 = scmp.eq.s32.totalorder %s25, 0
      %p197 = por %p195, %p196
      %p198 = scmp.ne.s32.totalorder %s190, %s192
      %p199 = scmp.eq.s32.totalorder %s30, 1
      %p200 = por %p198, %p199
      %p201 = scmp.ne.s32.totalorder %s192, %s193
      %p202 = scmp.eq.s32.totalorder %s30, 0
      %p203 = por %p201, %p202
      %p204 = scmp.ne.s32.totalorder %s192, %s193
      %p205 = scmp.eq.s32.totalorder %s31, 1
      %p206 = por %p204, %p205
      %p208 = scmp.ne.s32.totalorder %s193, %s207
      %p209 = scmp.eq.s32.totalorder %s31, 0
      %p210 = por %p208, %p209
      %s211 = ssub.s32 %s25, %s32
      %p212 = scmp.eq.s32.totalorder %s211, 0
      %s214 = sadd.s32 %s213, 1
      %s215 = scalar_select %p212, %s213, %s214
      %p218 = pneg %p212
      %p219 = scmp.eq.s32.totalorder %s25, 1
      %p220 = por %p218, %p219
      %p221 = scmp.ne.s32.totalorder %s213, %s216
      %p222 = scmp.eq.s32.totalorder %s25, 0
      %p223 = por %p221, %p222
      %p224 = scmp.ne.s32.totalorder %s213, %s216
      %p225 = scmp.eq.s32.totalorder %s30, 1
      %p226 = por %p224, %p225
      %p227 = scmp.ne.s32.totalorder %s216, %s217
      %p228 = scmp.eq.s32.totalorder %s30, 0
      %p229 = por %p227, %p228
      %p230 = scmp.ne.s32.totalorder %s216, %s217
      %p231 = scmp.eq.s32.totalorder %s31, 1
      %p232 = por %p230, %p231
      %p234 = scmp.ne.s32.totalorder %s217, %s233
      %p235 = scmp.eq.s32.totalorder %s31, 0
      %p236 = por %p234, %p235
      %p237 = scmp.le.s32.totalorder 1, %s25
      %p238 = scmp.lt.s32.totalorder %s25, 3
      %p239 = pnand %p237, %p238
      %p240 = pneg %p239
      // Predicated region
      $region9: #{tpu_custom_call.1} parent=5 // pred_check
        _
      $region10: #{tpu_custom_call.1} parent=5 // pred_check_branch
        %242 = sbr.rel (%p239) target = $region12
      $region11: #{tpu_custom_call.1} parent=5 // pred_region
        %s243 = ssub.s32 %s25, 1
        // Predicated region
        $region13: #{tpu_custom_call.1} parent=11 // pred_check
          %p244 = pneg %p46
        $region14: #{tpu_custom_call.1} parent=11 // pred_check_branch
          %246 = sbr.rel (%p244) target = $region16
        $region15: #{tpu_custom_call.1} parent=11 // pred_region
          %s248 = ssub.s32 16, 16
          %249 = vsyncadd [#allocation5], %s248
          %252 = dma.hbm_to_smem %s0, 16, [#allocation2], [#allocation5]
        $region16: #{tpu_custom_call.1} parent=11 // pred_fallthru
          _
        // Predicated region
        $region17: #{tpu_custom_call.1} parent=11 // pred_check
          %p253 = pneg %p119
        $region18: #{tpu_custom_call.1} parent=11 // pred_check_branch
          %255 = sbr.rel (%p253) target = $region20
        $region19: #{tpu_custom_call.1} parent=11 // pred_region
          _
        $region20: #{tpu_custom_call.1} parent=11 // pred_fallthru
          _
        // Predicated region
        $region21: #{tpu_custom_call.1} parent=11 // pred_check
          %p256 = pneg %p140
        $region22: #{tpu_custom_call.1} parent=11 // pred_check_branch
          %258 = sbr.rel (%p256) target = $region24
        $region23: #{tpu_custom_call.1} parent=11 // pred_region
          %s260 = ssub.s32 1024, 1024
          %261 = vsyncadd [#allocation8], %s260
          %s262 = sshll.u32 [#allocation9], 4
          %s263 = int_to_ptr.vmem [resolvable:$true] %s262
          %268 = dma.hbm_to_vmem [thread:$0]  %s4, 1024, %s263, [#allocation8], 64, 64, 4
        $region24: #{tpu_custom_call.1} parent=11 // pred_fallthru
          _
        // Predicated region
        $region25: #{tpu_custom_call.1} parent=11 // pred_check
          %p269 = pneg %p161
        $region26: #{tpu_custom_call.1} parent=11 // pred_check_branch
          %271 = sbr.rel (%p269) target = $region28
        $region27: #{tpu_custom_call.1} parent=11 // pred_region
          _
        $region28: #{tpu_custom_call.1} parent=11 // pred_fallthru
          _
        // Predicated region
        $region29: #{tpu_custom_call.1} parent=11 // pred_check
          %p272 = pneg %p182
        $region30: #{tpu_custom_call.1} parent=11 // pred_check_branch
          %274 = sbr.rel (%p272) target = $region32
        $region31: #{tpu_custom_call.1} parent=11 // pred_region
          %s276 = ssub.s32 1024, 1024
          %277 = vsyncadd [#allocation11], %s276
          %s278 = sshll.u32 [#allocation10], 4
          %s279 = int_to_ptr.vmem [resolvable:$true] %s278
          %284 = dma.hbm_to_vmem [thread:$0]  %s6, 1024, %s279, [#allocation11], 64, 64, 4
        $region32: #{tpu_custom_call.1} parent=11 // pred_fallthru
          _
        // Predicated region
        $region33: #{tpu_custom_call.1} parent=11 // pred_check
          %p285 = pneg %p203
        $region34: #{tpu_custom_call.1} parent=11 // pred_check_branch
          %287 = sbr.rel (%p285) target = $region36
        $region35: #{tpu_custom_call.1} parent=11 // pred_region
          %s289 = ssub.s32 1024, 1024
          %290 = vsyncadd [#allocation11], %s289
          %s291 = sshll.u32 [#allocation12], 4
          %s292 = int_to_ptr.vmem [resolvable:$true] %s291
          %297 = dma.hbm_to_vmem [thread:$0]  %s7, 1024, %s292, [#allocation11], 64, 64, 4
        $region36: #{tpu_custom_call.1} parent=11 // pred_fallthru
          _
      $region12: #{tpu_custom_call.1} parent=5 // pred_fallthru
        _
      %p298 = scmp.lt.s32.totalorder %s25, 2
      // Predicated region
      $region37: #{tpu_custom_call.1} parent=5 // pred_check
        %p299 = pneg %p298
      $region38: #{tpu_custom_call.1} parent=5 // pred_check_branch
        %301 = sbr.rel (%p299) target = $region40
      $region39: #{tpu_custom_call.1} parent=5 // pred_region
        // Predicated region
        $region41: #{tpu_custom_call.1} parent=39 // pred_check
          %p302 = pneg %p66
        $region42: #{tpu_custom_call.1} parent=39 // pred_check_branch
          %304 = sbr.rel (%p302) target = $region44
        $region43: #{tpu_custom_call.1} parent=39 // pred_region
          %s305 = sand.u32 %s56, 1
          %s306 = scalar_lea.sflag [#allocation3], %s305
          %s307 = sand.u32 %s56, 1
          %s308 = smul.addr %s307, 4
          %s309 = scalar_lea.vmem [#allocation6], %s308
          %s311 = ssub.s32 64, 64
          %312 = vsyncadd %s306, %s311
          %s313 = smul.addr %s25, 64
          %s314 = scalar_lea.hbm %s1, %s313
          %s316 = sshll.u32 %s309, 4
          %s317 = int_to_ptr.vmem [resolvable:$true] %s316
          %319 = dma.hbm_to_vmem [thread:$0]  %s314, 64, %s317, %s306
        $region44: #{tpu_custom_call.1} parent=39 // pred_fallthru
          _
        // Predicated region
        $region45: #{tpu_custom_call.1} parent=39 // pred_check
          %p320 = pneg %p92
        $region46: #{tpu_custom_call.1} parent=39 // pred_check_branch
          %322 = sbr.rel (%p320) target = $region48
        $region47: #{tpu_custom_call.1} parent=39 // pred_region
          %s323 = sand.u32 %s25, 1
          %s324 = scalar_lea.sflag [#allocation8], %s323
          %s325 = sand.u32 %s82, 1
          %s326 = smul.addr %s325, 4
          %s327 = scalar_lea.vmem [#allocation7], %s326
          %s329 = ssub.s32 64, 64
          %330 = vsyncadd %s324, %s329
          %s331 = smul.addr %s25, 64
          %s332 = scalar_lea.hbm %s2, %s331
          %s334 = sshll.u32 %s327, 4
          %s335 = int_to_ptr.vmem [resolvable:$true] %s334
          %337 = dma.hbm_to_vmem [thread:$0]  %s332, 64, %s335, %s324
        $region48: #{tpu_custom_call.1} parent=39 // pred_fallthru
          _
      $region40: #{tpu_custom_call.1} parent=5 // pred_fallthru
        _
      %p338 = scmp.le.s32.totalorder 1, %s25
      %p339 = scmp.lt.s32.totalorder %s25, 3
      %p340 = pnand %p338, %p339
      %p341 = pneg %p340
      // Predicated region
      $region49: #{tpu_custom_call.1} parent=5 // pred_check
        _
      $region50: #{tpu_custom_call.1} parent=5 // pred_check_branch
        %343 = sbr.rel (%p340) target = $region52
      $region51: #{tpu_custom_call.1} parent=5 // pred_region
        %s344 = ssub.s32 %s25, 1
        // Predicated region
        $region53: #{tpu_custom_call.1} parent=51 // pred_check
          %p345 = pneg %p46
        $region54: #{tpu_custom_call.1} parent=51 // pred_check_branch
          %347 = sbr.rel (%p345) target = $region56
        $region55: #{tpu_custom_call.1} parent=51 // pred_region
          %348 = dma.done [#allocation5], 16
        $region56: #{tpu_custom_call.1} parent=51 // pred_fallthru
          _
        %s349 = sand.u32 %s59, 1
        %s350 = scalar_lea.sflag [#allocation3], %s349
        %s351 = sand.u32 %s59, 1
        %s352 = smul.addr %s351, 4
        %s353 = scalar_lea.vmem [#allocation6], %s352
        // Predicated region
        $region57: #{tpu_custom_call.1} parent=51 // pred_check
          %p354 = pneg %p72
        $region58: #{tpu_custom_call.1} parent=51 // pred_check_branch
          %356 = sbr.rel (%p354) target = $region60
        $region59: #{tpu_custom_call.1} parent=51 // pred_region
          %357 = dma.done %s350, 64
        $region60: #{tpu_custom_call.1} parent=51 // pred_fallthru
          _
        %s358 = sand.u32 %s30, 1
        %s359 = scalar_lea.sflag [#allocation8], %s358
        %s360 = sand.u32 %s85, 1
        %s361 = smul.addr %s360, 4
        %s362 = scalar_lea.vmem [#allocation7], %s361
        // Predicated region
        $region61: #{tpu_custom_call.1} parent=51 // pred_check
          %p363 = pneg %p98
        $region62: #{tpu_custom_call.1} parent=51 // pred_check_branch
          %365 = sbr.rel (%p363) target = $region64
        $region63: #{tpu_custom_call.1} parent=51 // pred_region
          %366 = dma.done %s359, 64
        $region64: #{tpu_custom_call.1} parent=51 // pred_fallthru
          _
        // Predicated region
        $region65: #{tpu_custom_call.1} parent=51 // pred_check
          %p367 = pneg %p140
        $region66: #{tpu_custom_call.1} parent=51 // pred_check_branch
          %369 = sbr.rel (%p367) target = $region68
        $region67: #{tpu_custom_call.1} parent=51 // pred_region
          %370 = dma.done [#allocation8], 1024
        $region68: #{tpu_custom_call.1} parent=51 // pred_fallthru
          _
        // Predicated region
        $region69: #{tpu_custom_call.1} parent=51 // pred_check
          %p371 = pneg %p182
        $region70: #{tpu_custom_call.1} parent=51 // pred_check_branch
          %373 = sbr.rel (%p371) target = $region72
        $region71: #{tpu_custom_call.1} parent=51 // pred_region
          %374 = dma.done [#allocation11], 1024
        $region72: #{tpu_custom_call.1} parent=51 // pred_fallthru
          _
        // Predicated region
        $region73: #{tpu_custom_call.1} parent=51 // pred_check
          %p375 = pneg %p203
        $region74: #{tpu_custom_call.1} parent=51 // pred_check_branch
          %377 = sbr.rel (%p375) target = $region76
        $region75: #{tpu_custom_call.1} parent=51 // pred_region
          %378 = dma.done [#allocation11], 1024
        $region76: #{tpu_custom_call.1} parent=51 // pred_fallthru
          _
        %379 = sfence
        %p380 = pneg %p46
        %p381 = pneg %p43
        %s382 = sand.u32 %s59, 1
        %s383 = scalar_lea.sflag [#allocation3], %s382
        %s384 = sand.u32 %s59, 1
        %s385 = smul.addr %s384, 4
        %s386 = scalar_lea.vmem [#allocation6], %s385
        %p387 = pneg %p72
        %p388 = pneg %p69
        %s389 = sand.u32 %s30, 1
        %s390 = scalar_lea.sflag [#allocation8], %s389
        %s391 = sand.u32 %s85, 1
        %s392 = smul.addr %s391, 4
        %s393 = scalar_lea.vmem [#allocation7], %s392
        %p394 = pneg %p98
        %p395 = pneg %p95
        %p396 = pneg %p119
        %p397 = pneg %p116
        %p398 = pneg %p140
        %p399 = pneg %p137
        %p400 = pneg %p161
        %p401 = pneg %p158
        %p402 = pneg %p182
        %p403 = pneg %p179
        %p404 = pneg %p203
        %p405 = pneg %p200
        %p406 = pneg %p229
        %p407 = pneg %p226
        %s408 = sand.u32 %s216, 1
        %s409 = scalar_lea.sflag [#allocation4], %s408
        %s410 = sand.u32 %s216, 1
        %s411 = smul.addr %s410, 4
        %s412 = scalar_lea.vmem [#allocation13], %s411
        %v414 = vld [vmem:[%s353] sm:$0xf]
        %v415 = vunpack.c.l.bf16 %v414
        %v416 = vld [vmem:[%s362] sm:$0xf]
        %v417 = vunpack.c.l.bf16 %v416
        %v418 = vmul.f32 %v415, %v417
        %419 = vadd.xlane.f32.xlu0 %v418
        %v420 = vpop.xlane.xlu0 %419
        %v421 = vld [vmem:[%s3] sm:$0x1]
        %v422 = vld [vmem:[%s3 + $0x1] sm:$0x1]
        %v423 = vld [vmem:[%s3 + $0x2] sm:$0x1]
        %v424 = vlaneseq
        %v425 = vshrl.u32 %v424, 7
        %v426 = vsub.s32 0, %v425
        %v427 = vrot.slane %v421, %v426
        %v428 = vmul.f32 %v420, %v427
        %v429 = vlaneseq
        %v430 = vshrl.u32 %v429, 7
        %v431 = vsub.s32 0, %v430
        %v432 = vrot.slane %v422, %v431
        %v433 = vadd.f32 %v428, %v432
        %v434 = vmax.f32 %v433, 0.0
        %v435 = vlaneseq
        %v436 = vshrl.u32 %v435, 7
        %v437 = vsub.s32 0, %v436
        %v438 = vrot.slane %v423, %v437
        %v439 = vmul.f32 %v434, %v438
        %vm440 = vcmask 261120
        %v441 = vsel %vm440, %v439, 0.0
        %442 = vadd.xlane.f32.xlu0 %v441
        %v443 = vpop.xlane.xlu0 %442
        %s444 = sld [smem:[#allocation2]]
        %v445 = vstv %s444
        %v446 = vadd.f32 %v443, %v445
        %v447 = vxor.u32 %v446, 2147483648
        %v448 = vmul.f32 %v447, 1.442695
        %v449 = vpow.pop %v448
        %v450 = vadd.f32 %v449, 1.0
        %v451 = vrcp.pop %v450
        %v452 = vmul.f32 1.0, %v451
        %v453 = vsub.f32 %v415, %v417
        %v454 = vmul.f32 %v452, %v453
        %v455 = vadd.f32 %v417, %v454
        %v456 = vpack.c.bf16 %v455, %v455
        %v457 = vld [vmem:[#allocation9] sm:$0xf]
        %v458 = vld [vmem:[#allocation9 + $0x4] sm:$0xf]
        %v459 = vld [vmem:[#allocation9 + $0x8] sm:$0xf]
        %v460 = vld [vmem:[#allocation9 + $0xc] sm:$0xf]
        %v461 = vld [vmem:[#allocation9 + $0x10] sm:$0xf]
        %v462 = vld [vmem:[#allocation9 + $0x14] sm:$0xf]
        %v463 = vld [vmem:[#allocation9 + $0x18] sm:$0xf]
        %v464 = vld [vmem:[#allocation9 + $0x1c] sm:$0xf]
        %v465 = vld [vmem:[#allocation9 + $0x20] sm:$0xf]
        %v466 = vld [vmem:[#allocation9 + $0x24] sm:$0xf]
        %v467 = vld [vmem:[#allocation9 + $0x28] sm:$0xf]
        %v468 = vld [vmem:[#allocation9 + $0x2c] sm:$0xf]
        %v469 = vld [vmem:[#allocation9 + $0x30] sm:$0xf]
        %v470 = vld [vmem:[#allocation9 + $0x34] sm:$0xf]
        %v471 = vld [vmem:[#allocation9 + $0x38] sm:$0xf]
        %v472 = vld [vmem:[#allocation9 + $0x3c] sm:$0xf]
        %v473 = vld [vmem:[%s5] sm:$0x1]
        %v475 = vlaneseq
        %v476 = vshrl.u32 %v475, 7
        %v477 = vsub.s32 0, %v476
        %v478 = vrot.slane %v473, %v477
        %v496 = vunpack.c.l.b16 %v457
        %v497 = vunpack.c.l.b16 %v458
        %v498 = vunpack.c.l.b16 %v459
        %v499 = vunpack.c.l.b16 %v460
        %v500 = vunpack.c.l.b16 %v461
        %v501 = vunpack.c.l.b16 %v462
        %v502 = vunpack.c.l.b16 %v463
        %v503 = vunpack.c.l.b16 %v464
        %v504 = vunpack.c.l.b16 %v465
        %v505 = vunpack.c.l.b16 %v466
        %v506 = vunpack.c.l.b16 %v467
        %v507 = vunpack.c.l.b16 %v468
        %v508 = vunpack.c.l.b16 %v469
        %v509 = vunpack.c.l.b16 %v470
        %v510 = vunpack.c.l.b16 %v471
        %v511 = vunpack.c.l.b16 %v472
        %v512 = vpack.c.b16 %v497, %v496
        %v513 = vpack.c.b16 %v499, %v498
        %v514 = vpack.c.b16 %v501, %v500
        %v515 = vpack.c.b16 %v503, %v502
        %v516 = vpack.c.b16 %v505, %v504
        %v517 = vpack.c.b16 %v507, %v506
        %v518 = vpack.c.b16 %v509, %v508
        %v519 = vpack.c.b16 %v511, %v510
        %528 = vmatprep.subr.bf16.mxu0 0
        %529 = vmatpush1.bf16.msra.mxu0 %v512
        %530 = vmatprep.subr.bf16.mxu0 0
        %531 = vmatpush1.bf16.msra.mxu0 %v513
        %532 = vmatprep.subr.bf16.mxu0 0
        %533 = vmatpush1.bf16.msra.mxu0 %v514
        %534 = vmatprep.subr.bf16.mxu0 0
        %535 = vmatpush1.bf16.msra.mxu0 %v515
        %536 = vmatprep.subr.bf16.mxu0 0
        %537 = vmatpush1.bf16.msra.mxu0 %v516
        %538 = vmatprep.subr.bf16.mxu0 0
        %539 = vmatpush1.bf16.msra.mxu0 %v517
        %540 = vmatprep.subr.bf16.mxu0 0
        %541 = vmatpush1.bf16.msra.mxu0 %v518
        %542 = vmatprep.subr.bf16.mxu0 0
        %543 = vmatpush1.bf16.msra.mxu0 %v519
        %544 = vmatprep.subr.bf16.mxu0 0
        %545 = vmatpush1.bf16.msra.mxu0 0
        %546 = vmatprep.subr.bf16.mxu0 0
        %547 = vmatpush1.bf16.msra.mxu0 0
        %548 = vmatprep.subr.bf16.mxu0 0
        %549 = vmatpush1.bf16.msra.mxu0 0
        %550 = vmatprep.subr.bf16.mxu0 0
        %551 = vmatpush1.bf16.msra.mxu0 0
        %552 = vmatprep.subr.bf16.mxu0 0
        %553 = vmatpush1.bf16.msra.mxu0 0
        %554 = vmatprep.subr.bf16.mxu0 0
        %555 = vmatpush1.bf16.msra.mxu0 0
        %556 = vmatprep.subr.bf16.mxu0 0
        %557 = vmatpush1.bf16.msra.mxu0 0
        %558 = vmatprep.subr.bf16.mxu0 0
        %559 = vmatpush1.bf16.msra.mxu0 0
        %560 = vmatprep.mubr.bf16.mxu0 0
        %561 = vmatmul.mubr.bf16.gmra.mrb[0].mxu0 %v456
        %v562 = vpop.f32.mrb[0].mxu0
        %v563 = vadd.f32 %v478, %v562
        %v564 = vpop.f32.mrb[0].mxu0
        %v565 = vpop.f32.mrb[0].mxu0
        %v566 = vpop.f32.mrb[0].mxu0
        %567 = vdwg.mxu0
        %v568 = vpack.c.bf16 %v563, %v563
        %v569 = vld [vmem:[#allocation10] sm:$0xf]
        %v570 = vld [vmem:[#allocation10 + $0x4] sm:$0xf]
        %v571 = vld [vmem:[#allocation10 + $0x8] sm:$0xf]
        %v572 = vld [vmem:[#allocation10 + $0xc] sm:$0xf]
        %v573 = vld [vmem:[#allocation10 + $0x10] sm:$0xf]
        %v574 = vld [vmem:[#allocation10 + $0x14] sm:$0xf]
        %v575 = vld [vmem:[#allocation10 + $0x18] sm:$0xf]
        %v576 = vld [vmem:[#allocation10 + $0x1c] sm:$0xf]
        %v577 = vld [vmem:[#allocation10 + $0x20] sm:$0xf]
        %v578 = vld [vmem:[#allocation10 + $0x24] sm:$0xf]
        %v579 = vld [vmem:[#allocation10 + $0x28] sm:$0xf]
        %v580 = vld [vmem:[#allocation10 + $0x2c] sm:$0xf]
        %v581 = vld [vmem:[#allocation10 + $0x30] sm:$0xf]
        %v582 = vld [vmem:[#allocation10 + $0x34] sm:$0xf]
        %v583 = vld [vmem:[#allocation10 + $0x38] sm:$0xf]
        %v584 = vld [vmem:[#allocation10 + $0x3c] sm:$0xf]
        %v601 = vunpack.c.l.b16 %v569
        %v602 = vunpack.c.l.b16 %v570
        %v603 = vunpack.c.l.b16 %v571
        %v604 = vunpack.c.l.b16 %v572
        %v605 = vunpack.c.l.b16 %v573
        %v606 = vunpack.c.l.b16 %v574
        %v607 = vunpack.c.l.b16 %v575
        %v608 = vunpack.c.l.b16 %v576
        %v609 = vunpack.c.l.b16 %v577
        %v610 = vunpack.c.l.b16 %v578
        %v611 = vunpack.c.l.b16 %v579
        %v612 = vunpack.c.l.b16 %v580
        %v613 = vunpack.c.l.b16 %v581
        %v614 = vunpack.c.l.b16 %v582
        %v615 = vunpack.c.l.b16 %v583
        %v616 = vunpack.c.l.b16 %v584
        %v617 = vpack.c.b16 %v602, %v601
        %v618 = vpack.c.b16 %v604, %v603
        %v619 = vpack.c.b16 %v606, %v605
        %v620 = vpack.c.b16 %v608, %v607
        %v621 = vpack.c.b16 %v610, %v609
        %v622 = vpack.c.b16 %v612, %v611
        %v623 = vpack.c.b16 %v614, %v613
        %v624 = vpack.c.b16 %v616, %v615
        %633 = vmatprep.subr.bf16.mxu0 0
        %634 = vmatpush1.bf16.msra.mxu0 %v617
        %635 = vmatprep.subr.bf16.mxu0 0
        %636 = vmatpush1.bf16.msra.mxu0 %v618
        %637 = vmatprep.subr.bf16.mxu0 0
        %638 = vmatpush1.bf16.msra.mxu0 %v619
        %639 = vmatprep.subr.bf16.mxu0 0
        %640 = vmatpush1.bf16.msra.mxu0 %v620
        %641 = vmatprep.subr.bf16.mxu0 0
        %642 = vmatpush1.bf16.msra.mxu0 %v621
        %643 = vmatprep.subr.bf16.mxu0 0
        %644 = vmatpush1.bf16.msra.mxu0 %v622
        %645 = vmatprep.subr.bf16.mxu0 0
        %646 = vmatpush1.bf16.msra.mxu0 %v623
        %647 = vmatprep.subr.bf16.mxu0 0
        %648 = vmatpush1.bf16.msra.mxu0 %v624
        %649 = vmatprep.subr.bf16.mxu0 0
        %650 = vmatpush1.bf16.msra.mxu0 0
        %651 = vmatprep.subr.bf16.mxu0 0
        %652 = vmatpush1.bf16.msra.mxu0 0
        %653 = vmatprep.subr.bf16.mxu0 0
        %654 = vmatpush1.bf16.msra.mxu0 0
        %655 = vmatprep.subr.bf16.mxu0 0
        %656 = vmatpush1.bf16.msra.mxu0 0
        %657 = vmatprep.subr.bf16.mxu0 0
        %658 = vmatpush1.bf16.msra.mxu0 0
        %659 = vmatprep.subr.bf16.mxu0 0
        %660 = vmatpush1.bf16.msra.mxu0 0
        %661 = vmatprep.subr.bf16.mxu0 0
        %662 = vmatpush1.bf16.msra.mxu0 0
        %663 = vmatprep.subr.bf16.mxu0 0
        %664 = vmatpush1.bf16.msra.mxu0 0
        %665 = vmatprep.mubr.bf16.mxu0 0
        %666 = vmatmul.mubr.bf16.gmra.mrb[0].mxu0 %v568
        %v667 = vpop.f32.mrb[0].mxu0
        %v668 = vadd.f32 0.0, %v667
        %v669 = vpop.f32.mrb[0].mxu0
        %v670 = vpop.f32.mrb[0].mxu0
        %v671 = vpop.f32.mrb[0].mxu0
        %672 = vdwg.mxu0
        %v673 = vmax.f32 %v668, 0.0
        %v674 = vpack.c.bf16 %v673, %v673
        %v675 = vld [vmem:[#allocation12] sm:$0xf]
        %v676 = vld [vmem:[#allocation12 + $0x4] sm:$0xf]
        %v677 = vld [vmem:[#allocation12 + $0x8] sm:$0xf]
        %v678 = vld [vmem:[#allocation12 + $0xc] sm:$0xf]
        %v679 = vld [vmem:[#allocation12 + $0x10] sm:$0xf]
        %v680 = vld [vmem:[#allocation12 + $0x14] sm:$0xf]
        %v681 = vld [vmem:[#allocation12 + $0x18] sm:$0xf]
        %v682 = vld [vmem:[#allocation12 + $0x1c] sm:$0xf]
        %v683 = vld [vmem:[#allocation12 + $0x20] sm:$0xf]
        %v684 = vld [vmem:[#allocation12 + $0x24] sm:$0xf]
        %v685 = vld [vmem:[#allocation12 + $0x28] sm:$0xf]
        %v686 = vld [vmem:[#allocation12 + $0x2c] sm:$0xf]
        %v687 = vld [vmem:[#allocation12 + $0x30] sm:$0xf]
        %v688 = vld [vmem:[#allocation12 + $0x34] sm:$0xf]
        %v689 = vld [vmem:[#allocation12 + $0x38] sm:$0xf]
        %v690 = vld [vmem:[#allocation12 + $0x3c] sm:$0xf]
        %v707 = vunpack.c.l.b16 %v675
        %v708 = vunpack.c.l.b16 %v676
        %v709 = vunpack.c.l.b16 %v677
        %v710 = vunpack.c.l.b16 %v678
        %v711 = vunpack.c.l.b16 %v679
        %v712 = vunpack.c.l.b16 %v680
        %v713 = vunpack.c.l.b16 %v681
        %v714 = vunpack.c.l.b16 %v682
        %v715 = vunpack.c.l.b16 %v683
        %v716 = vunpack.c.l.b16 %v684
        %v717 = vunpack.c.l.b16 %v685
        %v718 = vunpack.c.l.b16 %v686
        %v719 = vunpack.c.l.b16 %v687
        %v720 = vunpack.c.l.b16 %v688
        %v721 = vunpack.c.l.b16 %v689
        %v722 = vunpack.c.l.b16 %v690
        %v723 = vpack.c.b16 %v708, %v707
        %v724 = vpack.c.b16 %v710, %v709
        %v725 = vpack.c.b16 %v712, %v711
        %v726 = vpack.c.b16 %v714, %v713
        %v727 = vpack.c.b16 %v716, %v715
        %v728 = vpack.c.b16 %v718, %v717
        %v729 = vpack.c.b16 %v720, %v719
        %v730 = vpack.c.b16 %v722, %v721
        %739 = vmatprep.subr.bf16.mxu0 0
        %740 = vmatpush1.bf16.msra.mxu0 %v723
        %741 = vmatprep.subr.bf16.mxu0 0
        %742 = vmatpush1.bf16.msra.mxu0 %v724
        %743 = vmatprep.subr.bf16.mxu0 0
        %744 = vmatpush1.bf16.msra.mxu0 %v725
        %745 = vmatprep.subr.bf16.mxu0 0
        %746 = vmatpush1.bf16.msra.mxu0 %v726
        %747 = vmatprep.subr.bf16.mxu0 0
        %748 = vmatpush1.bf16.msra.mxu0 %v727
        %749 = vmatprep.subr.bf16.mxu0 0
        %750 = vmatpush1.bf16.msra.mxu0 %v728
        %751 = vmatprep.subr.bf16.mxu0 0
        %752 = vmatpush1.bf16.msra.mxu0 %v729
        %753 = vmatprep.subr.bf16.mxu0 0
        %754 = vmatpush1.bf16.msra.mxu0 %v730
        %755 = vmatprep.subr.bf16.mxu0 0
        %756 = vmatpush1.bf16.msra.mxu0 0
        %757 = vmatprep.subr.bf16.mxu0 0
        %758 = vmatpush1.bf16.msra.mxu0 0
        %759 = vmatprep.subr.bf16.mxu0 0
        %760 = vmatpush1.bf16.msra.mxu0 0
        %761 = vmatprep.subr.bf16.mxu0 0
        %762 = vmatpush1.bf16.msra.mxu0 0
        %763 = vmatprep.subr.bf16.mxu0 0
        %764 = vmatpush1.bf16.msra.mxu0 0
        %765 = vmatprep.subr.bf16.mxu0 0
        %766 = vmatpush1.bf16.msra.mxu0 0
        %767 = vmatprep.subr.bf16.mxu0 0
        %768 = vmatpush1.bf16.msra.mxu0 0
        %769 = vmatprep.subr.bf16.mxu0 0
        %770 = vmatpush1.bf16.msra.mxu0 0
        %771 = vmatprep.mubr.bf16.mxu0 0
        %772 = vmatmul.mubr.bf16.gmra.mrb[0].mxu0 %v674
        %v773 = vpop.f32.mrb[0].mxu0
        %v774 = vadd.f32 0.0, %v773
        %v775 = vpop.f32.mrb[0].mxu0
        %v776 = vpop.f32.mrb[0].mxu0
        %v777 = vpop.f32.mrb[0].mxu0
        %778 = vdwg.mxu0
        %v779 = vxor.u32 %v774, 2147483648
        %v780 = vmul.f32 %v779, 1.442695
        %v781 = vpow.pop %v780
        %v782 = vadd.f32 %v781, 1.0
        %v783 = vrcp.pop %v782
        %v784 = vmul.f32 1.0, %v783
        %v785 = vmul.f32 %v563, %v784
        %786 = vadd.xlane.f32.xlu0 %v785
        %v787 = vpop.xlane.xlu0 %786
        %v788 = vrcp.pop 128.0
        %v789 = vmul.f32 %v787, %v788
        %790 = vmax.xlane.f32.xlu0 %v785
        %v791 = vpop.xlane.xlu0 %790
        %s792 = sld [smem:[#allocation2 + $0x1]]
        %v793 = vstv %s792
        %v794 = vmul.f32 %v789, %v793
        %s795 = sld [smem:[#allocation2 + $0x2]]
        %v796 = vstv %s795
        %v797 = vmul.f32 %v791, %v796
        %v798 = vadd.f32 %v794, %v797
        %v799 = vxor.u32 %v798, 2147483648
        %v800 = vmul.f32 %v799, 1.442695
        %v801 = vpow.pop %v800
        %v802 = vadd.f32 %v801, 1.0
        %v803 = vrcp.pop %v802
        %v804 = vmul.f32 1.0, %v803
        %v805 = vmul.f32 %v785, %v804
        %v806 = vpack.c.bf16 %v805, %v805
        %807 = vst [vmem:[%s412] sm:$0xf] %v806
        %s808 = sand.u32 %s216, 1
        %s809 = scalar_lea.sflag [#allocation4], %s808
        %s810 = sand.u32 %s216, 1
        %s811 = smul.addr %s810, 4
        %s812 = scalar_lea.vmem [#allocation13], %s811
        // Predicated region
        $region77: #{tpu_custom_call.1} parent=51 // pred_check
          %p813 = pneg %p226
        $region78: #{tpu_custom_call.1} parent=51 // pred_check_branch
          %815 = sbr.rel (%p813) target = $region80
        $region79: #{tpu_custom_call.1} parent=51 // pred_region
          %s817 = ssub.s32 64, 64
          %818 = vsyncadd %s809, %s817
          %s819 = smul.addr %s30, 64
          %s820 = scalar_lea.hbm %s8, %s819
          %s822 = sshll.u32 %s812, 4
          %s823 = int_to_ptr.vmem [resolvable:$true] %s822
          %825 = dma.vmem_to_hbm [thread:$0]  %s823, 64, %s820, %s809
        $region80: #{tpu_custom_call.1} parent=51 // pred_fallthru
          _
      $region52: #{tpu_custom_call.1} parent=5 // pred_fallthru
        _
      %p826 = scmp.le.s32.totalorder 2, %s25
      // Predicated region
      $region81: #{tpu_custom_call.1} parent=5 // pred_check
        %p827 = pneg %p826
      $region82: #{tpu_custom_call.1} parent=5 // pred_check_branch
        %829 = sbr.rel (%p827) target = $region84
      $region83: #{tpu_custom_call.1} parent=5 // pred_region
        %s830 = ssub.s32 %s25, 2
        // Predicated region
        $region85: #{tpu_custom_call.1} parent=83 // pred_check
          %p831 = pneg %p232
        $region86: #{tpu_custom_call.1} parent=83 // pred_check_branch
          %833 = sbr.rel (%p831) target = $region88
        $region87: #{tpu_custom_call.1} parent=83 // pred_region
          %s834 = sand.u32 %s217, 1
          %s835 = scalar_lea.sflag [#allocation4], %s834
          %s836 = sand.u32 %s217, 1
          %s837 = smul.addr %s836, 4
          %s838 = scalar_lea.vmem [#allocation13], %s837
          %839 = dma.done %s835, 64
        $region88: #{tpu_custom_call.1} parent=83 // pred_fallthru
          _
      $region84: #{tpu_custom_call.1} parent=5 // pred_fallthru
        _
    $region6: #{tpu_custom_call.1} parent=1 // loop_footer
      %s29 = sadd.s32 1, %s25
    $region7: #{tpu_custom_call.1} parent=1 // loop_footer_branch
      %24 = sbr.rel target = $region3
    $region8: #{tpu_custom_call.1} parent=1 // loop_exit
      _
    %840 = vsyncpa [#allocation3], 1
    %s841 = scalar_lea.sflag [#allocation3], 1
    %842 = vsyncpa %s841, 1
    %843 = vsyncpa [#allocation8], 1
    %s844 = scalar_lea.sflag [#allocation8], 1
    %845 = vsyncpa %s844, 1
    %846 = vsyncpa [#allocation11], 1
    %847 = vsyncpa [#allocation4], 1
    %s848 = scalar_lea.sflag [#allocation4], 1
    %849 = vsyncpa %s848, 1
    %850 = vsyncpa [#allocation5], 1
    %s851 = scalar_lea.sflag [#allocation5], 1
    %852 = vsyncpa %s851, 1

</llo_original>
